<compile_context>
chip_gen: v7x
topology: tpu7x:2x2x1
jax: 0.10.0
libtpu: 0.0.40
codegen_flags: <defaults>
</compile_context>

<pallas_src>
import functools

import jax
import jax.numpy as jnp
from jax.experimental import pallas as pl
from jax.experimental.pallas import tpu as pltpu

_LANE = 128
_SUBLANE = 8
_VREG = _LANE * _SUBLANE  # 1024 f32 elements per (8, 128) vreg


def _mm_vpu_kernel(w_ref, xt_ref, o_ref):
    """VPU-only mm for tiny K, N: out^T[n] = sum_k x1[k, n] * x2^T[k].

    w_ref : SMEM (K*N,) f32      -- row-major flattening of x1 (K, N)
    xt_ref: VMEM (K, Sp, 128)    -- x2^T with M padded to Sp*128 (lane-dense)
    o_ref : VMEM (N, Sp, 128)    -- out^T, lane-dense along M
    """
    K = xt_ref.shape[0]
    N = o_ref.shape[0]
    # K and N are tiny and static: fully unroll.  SMEM scalars broadcast onto
    # the VPU; no MXU instruction is ever issued.
    for n in range(N):
        acc = xt_ref[0].astype(jnp.float32) * w_ref[n]                # x1[0, n]
        for k in range(1, K):
            acc = acc + xt_ref[k].astype(jnp.float32) * w_ref[k * N + n]  # x1[k, n]
        o_ref[n] = acc.astype(o_ref.dtype)


@jax.jit
def pallas_mm(x2: jax.Array, x1: jax.Array) -> jax.Array:
    """Computes x2 @ x1 (torch.mm(x2, x1)) with a Pallas TPU kernel.

    Specialized for the module's regime: long M, tiny K and N.  The whole
    function is jitted so the layout plumbing around the pallas_call fuses
    into 1-2 small XLA fusions and everything dispatches once.
    """
    M, K = x2.shape
    K2, N = x1.shape
    assert K == K2, f"inner dims must match, got {K} vs {K2}"
    out_dtype = jnp.result_type(x2.dtype, x1.dtype)

    # Keep bf16 inputs bf16 in VMEM (upcast in-kernel); everything else f32.
    vmem_dtype = jnp.bfloat16 if x2.dtype == jnp.bfloat16 else jnp.float32

    # Pad M up to a whole number of (8, 128) vregs so every vector load/store
    # in the kernel is full-width and unmasked.
    Mp = max(_VREG, ((M + _VREG - 1) // _VREG) * _VREG)
    Sp = Mp // _LANE  # multiple of 8 sublanes

    # Wrapper-side layout plumbing (~10 KiB; fuses under jit).
    x2t = jnp.pad(x2.astype(vmem_dtype).T, ((0, 0), (0, Mp - M)))  # (K, Mp)
    x2t = x2t.reshape(K, Sp, _LANE)                                # (K, Sp, 128)
    w = x1.astype(jnp.float32).reshape(-1)                         # (K*N,) scalars

    # True (tiny) cost so XLA doesn't serialize around an "opaque" custom call.
    cost = pl.CostEstimate(
        flops=2 * M * K * N,
        transcendentals=0,
        bytes_accessed=4 * (M * K + K * N + M * N),
    )

    out_t = pl.pallas_call(
        _mm_vpu_kernel,
        out_shape=jax.ShapeDtypeStruct((N, Sp, _LANE), out_dtype),
        in_specs=[
            pl.BlockSpec(memory_space=pltpu.MemorySpace.SMEM),  # x1 scalars
            pl.BlockSpec(memory_space=pltpu.MemorySpace.VMEM),  # x2^T, whole array
        ],
        out_specs=pl.BlockSpec(memory_space=pltpu.MemorySpace.VMEM),
        cost_estimate=cost,
    )(w, x2t)

    if N == 1:
        # Pure reshapes: never materializes a transpose copy.
        return out_t.reshape(Mp)[:M].reshape(M, 1)
    # General tiny-N fallback: (N, Sp, 128) -> (N, Mp) -> drop pad -> (M, N).
    return out_t.reshape(N, Mp)[:, :M].T


if __name__ == "__main__":
    key = jax.random.PRNGKey(0)
    k1, k2 = jax.random.split(key)

    # Shapes implied by the forward pass mm(x2, x1): x2 (M, K), x1 (K, N).
    x2 = jax.random.normal(k1, (1321, 2), dtype=jnp.float32)  # (M, K)
    x1 = jax.random.normal(k2, (2, 1), dtype=jnp.float32)     # (K, N)

    out = pallas_mm(x2, x1)
    jax.block_until_ready(out)

    # Correctness check against plain JAX matmul.
    ref = x2 @ x1
    assert out.shape == (1321, 1)
    assert jnp.allclose(out, ref, atol=1e-5, rtol=1e-5), "mismatch vs reference"

    print("KERNEL_OK")
</pallas_src>

<mosaic_0001>
module attributes {stable_mosaic.version = 11 : i64} {
  func.func @_mm_vpu_kernel(%arg0: memref<2xf32, #tpu.memory_space<smem>>, %arg1: memref<2x16x128xf32, #tpu.memory_space<vmem>>, %arg2: memref<1x16x128xf32, #tpu.memory_space<vmem>>) attributes {dimension_semantics = [], scalar_prefetch = 0 : i64, scratch_operands = 0 : i64, tpu.core_type = #tpu.core_type<tc>} {
    %c0 = arith.constant 0 : index
    %c0_0 = arith.constant 0 : index
    %c0_1 = arith.constant 0 : index
    %0 = vector.load %arg1[%c0, %c0_0, %c0_1] : memref<2x16x128xf32, #tpu.memory_space<vmem>>, vector<1x16x128xf32>
    %1 = vector.shape_cast %0 : vector<1x16x128xf32> to vector<16x128xf32>
    %c0_2 = arith.constant 0 : index
    %2 = memref.load %arg0[%c0_2] : memref<2xf32, #tpu.memory_space<smem>>
    %3 = vector.broadcast %2 : f32 to vector<16x128xf32>
    %4 = arith.mulf %1, %3 : vector<16x128xf32>
    %c1 = arith.constant 1 : index
    %c0_3 = arith.constant 0 : index
    %c0_4 = arith.constant 0 : index
    %5 = vector.load %arg1[%c1, %c0_3, %c0_4] : memref<2x16x128xf32, #tpu.memory_space<vmem>>, vector<1x16x128xf32>
    %6 = vector.shape_cast %5 : vector<1x16x128xf32> to vector<16x128xf32>
    %c1_5 = arith.constant 1 : index
    %7 = memref.load %arg0[%c1_5] : memref<2xf32, #tpu.memory_space<smem>>
    %8 = vector.broadcast %7 : f32 to vector<16x128xf32>
    %9 = arith.mulf %6, %8 : vector<16x128xf32>
    %10 = arith.addf %4, %9 : vector<16x128xf32>
    %c0_6 = arith.constant 0 : index
    %c0_7 = arith.constant 0 : index
    %c0_8 = arith.constant 0 : index
    %11 = vector.load %arg2[%c0_6, %c0_7, %c0_8] : memref<1x16x128xf32, #tpu.memory_space<vmem>>, vector<1x16x128xf32>
    %12 = vector.shape_cast %11 : vector<1x16x128xf32> to vector<16x128xf32>
    %13 = vector.shape_cast %10 : vector<16x128xf32> to vector<1x16x128xf32>
    tpu.vector_store %arg2[%c0_6, %c0_7, %c0_8], %13 {strides = array<i32>} : memref<1x16x128xf32, #tpu.memory_space<vmem>>, vector<1x16x128xf32>,
    return
  }
}

</mosaic_0001>

<llo_original>
// kernel: pallas_mm.1
$region0: #{pallas_mm.1}
  #allocation0 [shape = 'u32[]', space=smem, size = 0x4, offset = 0x4, fixed_abs, tag = 'smem constant byte address 0x4 - core index']
  #allocation1 [shape = 'u32[144,128]{1,0:T(1,128)}', space=vmem, size = 0x12000, scoped, tag = 'internal scratch']
  %s0 = inlined_call_operand.vmem [shape: f32[2], index: 0, kind: input, shape index: {}]
  %s1 = inlined_call_operand.vmem [shape: f32[2,16,128], index: 1, kind: input, shape index: {}]
  %s2 = inlined_call_operand.vmem [shape: f32[1,16,128], index: 2, kind: output, shape index: {}]
  %s3 = sld [smem:[#allocation0]]
  $region22: #{pallas_mm.1} parent=0
    _
  %s5 = ssub.s32 1, %s3
  %s6 = scalar_select 0, %s5, %s3
  $region1: #{pallas_mm.1} parent=0
    #allocation2 [shape = 'u8[512]{0}', space=smem, size = 0x200, scoped, tag = 'input window, operand 0, single buffered']
    #allocation3 [shape = 's32[1]{0}', space=sflag, size = 0x4, scoped, tag = 'scoped memory for pallas_mm.1']
    %7 = vsyncpa [#allocation3], 0
    // Predicated region
    $region2: #{pallas_mm.1} parent=1 // pred_check
      _
    $region3: #{pallas_mm.1} parent=1 // pred_check_branch
      %9 = sbr.rel (0) target = $region5
    $region4: #{pallas_mm.1} parent=1 // pred_region
      %s11 = ssub.s32 16, 16
      %12 = vsyncadd [#allocation3], %s11
      %s14 = sshll.u32 %s0, 4
      %s15 = int_to_ptr.vmem [resolvable:$true] %s14
      %17 = dma.vmem_to_smem %s15, 16, [#allocation2], [#allocation3]
    $region5: #{pallas_mm.1} parent=1 // pred_fallthru
      _
    // Predicated region
    $region6: #{pallas_mm.1} parent=1 // pred_check
      _
    $region7: #{pallas_mm.1} parent=1 // pred_check_branch
      %19 = sbr.rel (0) target = $region9
    $region8: #{pallas_mm.1} parent=1 // pred_region
      _
    $region9: #{pallas_mm.1} parent=1 // pred_fallthru
      _
    // Predicated region
    $region10: #{pallas_mm.1} parent=1 // pred_check
      _
    $region11: #{pallas_mm.1} parent=1 // pred_check_branch
      %21 = sbr.rel (0) target = $region13
    $region12: #{pallas_mm.1} parent=1 // pred_region
      %22 = dma.done [#allocation3], 16
    $region13: #{pallas_mm.1} parent=1 // pred_fallthru
      _
    %23 = sfence
    %v24 = vld [vmem:[%s1] sm:$0xff]
    %v25 = vld [vmem:[%s1 + $0x8] sm:$0xff]
    %s26 = sld [smem:[#allocation2]]
    %v27 = vstv %s26
    %v28 = vmul.f32 %v24, %v27
    %v29 = vmul.f32 %v25, %v27
    %s30 = scalar_lea.vmem %s1, 16
    %v31 = vld [vmem:[%s30] sm:$0xff]
    %v32 = vld [vmem:[%s30 + $0x8] sm:$0xff]
    %s33 = sld [smem:[#allocation2 + $0x1]]
    %v34 = vstv %s33
    %v35 = vmul.f32 %v31, %v34
    %v36 = vmul.f32 %v32, %v34
    %v37 = vadd.f32 %v28, %v35
    %v38 = vadd.f32 %v29, %v36
    %39 = vst [vmem:[%s2] sm:$0xff] %v37
    %40 = vst [vmem:[%s2 + $0x8] sm:$0xff] %v38
    // Predicated region
    $region14: #{pallas_mm.1} parent=1 // pred_check
      _
    $region15: #{pallas_mm.1} parent=1 // pred_check_branch
      %42 = sbr.rel (0) target = $region17
    $region16: #{pallas_mm.1} parent=1 // pred_region
      _
    $region17: #{pallas_mm.1} parent=1 // pred_fallthru
      _
    // Predicated region
    $region18: #{pallas_mm.1} parent=1 // pred_check
      _
    $region19: #{pallas_mm.1} parent=1 // pred_check_branch
      %44 = sbr.rel (0) target = $region21
    $region20: #{pallas_mm.1} parent=1 // pred_region
      _
    $region21: #{pallas_mm.1} parent=1 // pred_fallthru
      _
    %45 = vsyncpa [#allocation3], 1

</llo_original>
